<compile_context>
chip_gen: v7x
topology: tpu7x:2x2x1
jax: 0.10.0
libtpu: 0.0.40
codegen_flags: <defaults>
</compile_context>

<pallas_src>
import jax
import jax.numpy as jnp
from jax.experimental import pallas as pl
from jax.experimental.pallas import tpu as pltpu


_DMA_RING = 32                        # outstanding per-row gather DMAs (HBM path)
_UNROLL = 4                           # issue/wait loop unroll factor (HBM path)
_GROUP = 8                            # rows gathered per step (VMEM fast path)
_VMEM_BUDGET = 10 * 1024 * 1024       # conservative across v5e/v6e/v7x
_SMALL_TABLE_BYTES = 2 * 1024 * 1024  # threshold for the VMEM-resident table path


def _round_up(x, m):
    return (x + m - 1) // m * m


def _pick_tile(batch, cap):
    """Pick a batch tile (multiple of 8).

    Prefer a divisor of `batch` (no padding and no post-kernel slice) and leave at
    least two grid steps when batch >= 16 so both TensorCores get work on v7x.
    """
    cap = max(8, cap - cap % 8)
    limit = min(cap, _round_up(batch, 8))
    if batch >= 16:
        limit = min(limit, max(8, batch // 2))
    limit = max(8, limit - limit % 8)
    t = limit
    while t >= 8:
        if batch % t == 0:
            return t, batch                    # exact tiling, no padding
        t -= 8
    return limit, _round_up(batch, limit)      # fallback: pad + slice after


def _make_vmem_gather_kernel(tile_b, group, training):
    """Gather from a VMEM-resident weights table with dynamic row-slice loads."""

    def kernel(ids_ref, w_ref, *refs):
        if training:
            out_ref, local_w_ref = refs
            dst_ref = local_w_ref              # gather straight into the f32 output
        else:
            out_ref, staging_ref = refs
            dst_ref = staging_ref

        base = pl.program_id(0) * tile_b
        d = dst_ref.shape[1]
        # Hoisted once (JAX does not CSE broadcast_in_dim inside loops).
        row_sel = jax.lax.broadcasted_iota(jnp.int32, (group, d), 0)

        @pl.loop(0, tile_b // group)
        def _gather(g):
            r0 = pl.multiple_of(g * group, group)
            block = None
            for u in range(group):
                rid = ids_ref[base + g * group + u]
                row = jnp.broadcast_to(w_ref[pl.ds(rid, 1), :], (group, d))
                block = row if block is None else jnp.where(row_sel == u, row, block)
            # Aligned (multiple-of-8) f32 block store.
            dst_ref[pl.ds(r0, group), :] = block

        # Single lane/sublane-dense cast + store of the whole output tile.
        out_ref[...] = dst_ref[...].astype(out_ref.dtype)

    return kernel


def _make_hbm_gather_kernel(tile_b, ring, unroll, training):
    """Gather rows from an HBM-resident table with a deep ring of async DMAs."""
    ring = min(ring, tile_b)
    assert tile_b % unroll == 0 and ring % unroll == 0

    def kernel(ids_ref, w_hbm_ref, *refs):
        if training:
            out_ref, local_w_ref, sems = refs
            dst_ref = local_w_ref              # DMA straight into the f32 output block
        else:
            out_ref, staging_ref, sems = refs
            dst_ref = staging_ref

        base = pl.program_id(0) * tile_b

        def issue(t, row_id):
            pltpu.make_async_copy(
                w_hbm_ref.at[pl.ds(row_id, 1), :],
                dst_ref.at[pl.ds(t, 1), :],
                sems.at[t % ring],
            ).start()

        def wait(t):
            # wait() only needs the dst shape + semaphore to know the transfer size.
            pltpu.make_async_copy(
                w_hbm_ref.at[pl.ds(0, 1), :],
                dst_ref.at[pl.ds(t, 1), :],
                sems.at[t % ring],
            ).wait()

        # Prime the DMA ring.
        @pl.loop(0, ring // unroll)
        def _prime(g):
            for u in range(unroll):
                t = g * unroll + u
                issue(t, ids_ref[base + t])

        # Steady state: keep `ring` DMAs in flight.
        if tile_b > ring:                      # static Python-time check
            @pl.loop(0, (tile_b - ring) // unroll)
            def _steady(g):
                t0 = g * unroll
                # Hoist the SMEM id reads above the semaphore waits.
                next_ids = [ids_ref[base + t0 + u + ring] for u in range(unroll)]
                for u in range(unroll):
                    t = t0 + u
                    wait(t)
                    issue(t + ring, next_ids[u])

        # Drain the last `ring` rows.
        @pl.loop(0, ring // unroll)
        def _drain(g):
            for u in range(unroll):
                wait((tile_b - ring) + g * unroll + u)

        # Single lane/sublane-dense cast + store of the whole output tile.
        out_ref[...] = dst_ref[...].astype(out_ref.dtype)

    return kernel


def casted_sparse_embedding_forward(weights, inputs, cast_to=jnp.bfloat16,
                                    training=True, force_hbm_path=False):
    """weights: [N, D] f32, inputs: [B] int.

    training=True  -> (out [B,D] cast_to, local_weights [B,D] f32, local_ids [B] i32)
    training=False -> out [B,D] cast_to
    """
    N, D = weights.shape
    B = inputs.shape[0]
    inputs = inputs.astype(jnp.int32)

    # Safety: clamp ids so the data-dependent gather never leaves the table.
    # TODO(synk): PyTorch would error on out-of-range ids; here they are clamped
    # while local_ids still returns the raw inputs.
    safe_ids = jnp.clip(inputs, 0, N - 1)

    cast_dtype = jnp.dtype(cast_to)
    table_bytes = _round_up(N, 8) * _round_up(D, 128) * 4
    vmem_gather = (table_bytes <= _SMALL_TABLE_BYTES) and not force_hbm_path

    # Mode-aware per-batch-row VMEM bytes:
    #   cast output (double-buffered) + f32 local_weights output (double-buffered,
    #   training) or f32 staging scratch (eval).
    row_bytes = 2 * cast_dtype.itemsize * D + (2 * 4 * D if training else 4 * D)

    budget = _VMEM_BUDGET - (2 * table_bytes if vmem_gather else 0)
    budget = max(budget, 1 << 20)
    cap = max(8, min(1024, budget // row_bytes))
    tile_b, padded_b = _pick_tile(B, cap)

    if padded_b != B:
        safe_ids = jnp.concatenate(
            [safe_ids, jnp.zeros((padded_b - B,), jnp.int32)])

    grid = (padded_b // tile_b,)

    if training:
        out_shape = (
            jax.ShapeDtypeStruct((padded_b, D), cast_dtype),     # forward output
            jax.ShapeDtypeStruct((padded_b, D), jnp.float32),    # local_weights
        )
        out_specs = (
            pl.BlockSpec((tile_b, D), lambda i, ids: (i, 0)),
            pl.BlockSpec((tile_b, D), lambda i, ids: (i, 0)),
        )
    else:
        out_shape = jax.ShapeDtypeStruct((padded_b, D), cast_dtype)
        out_specs = pl.BlockSpec((tile_b, D), lambda i, ids: (i, 0))

    if vmem_gather:
        kernel = _make_vmem_gather_kernel(tile_b, _GROUP, training)
        # Whole table resident in VMEM; grid-invariant block -> fetched once.
        in_specs = [pl.BlockSpec((N, D), lambda i, ids: (0, 0))]
        scratch_shapes = [] if training else [pltpu.VMEM((tile_b, D), jnp.float32)]
        footprint = 2 * table_bytes + tile_b * row_bytes
    else:
        ring = min(_DMA_RING, tile_b)
        kernel = _make_hbm_gather_kernel(tile_b, _DMA_RING, _UNROLL, training)
        in_specs = [pl.BlockSpec(memory_space=pl.ANY)]           # table stays in HBM
        scratch_shapes = [] if training else [pltpu.VMEM((tile_b, D), jnp.float32)]
        scratch_shapes = scratch_shapes + [pltpu.SemaphoreType.DMA((ring,))]
        footprint = tile_b * row_bytes
    vmem_limit = max(footprint + 4 * 1024 * 1024, 16 * 1024 * 1024)

    result = pl.pallas_call(
        kernel,
        out_shape=out_shape,
        grid_spec=pltpu.PrefetchScalarGridSpec(
            num_scalar_prefetch=1,
            grid=grid,
            in_specs=in_specs,
            out_specs=out_specs,
            scratch_shapes=scratch_shapes,
        ),
        compiler_params=pltpu.CompilerParams(
            dimension_semantics=("parallel",),
            vmem_limit_bytes=int(vmem_limit)),
    )(safe_ids, weights)

    if training:
        out, local_w = result
        if padded_b != B:
            out, local_w = out[:B], local_w[:B]
        # local_ids.copy_(inputs) -- plain buffer copy, no kernel needed.
        # TODO(synk): requires_grad local_weights / sparse-optimizer gradient
        # plumbing has no Pallas equivalent; forward values match exactly.
        return out, local_w, inputs
    out = result
    if padded_b != B:
        out = out[:B]
    return out


def _trunc_normal_init(key, shape, std):
    # Stand-in for trunc_normal_init_ (truncated at +/- 2 std).
    return std * jax.random.truncated_normal(key, -2.0, 2.0, shape, jnp.float32)


if __name__ == "__main__":
    key = jax.random.PRNGKey(0)
    k_w, k_ids = jax.random.split(key)

    num_embeddings = 64
    embedding_dim = 128       # multiple of 128 -> lane-dense stores
    batch_size = 8
    init_std = 0.02
    cast_to = jnp.bfloat16

    weights = _trunc_normal_init(k_w, (num_embeddings, embedding_dim), init_std)
    inputs = jax.random.randint(k_ids, (batch_size,), 0, num_embeddings, jnp.int32)

    ref_gather = jnp.take(weights, inputs, axis=0)
    ref_out = ref_gather.astype(cast_to)

    # Training mode, small-table VMEM-resident gather (fast path).
    out, local_w, local_ids = casted_sparse_embedding_forward(
        weights, inputs, cast_to=cast_to, training=True)
    jax.block_until_ready((out, local_w, local_ids))
    assert out.shape == (batch_size, embedding_dim) and out.dtype == cast_to
    assert jnp.array_equal(out, ref_out)
    assert jnp.array_equal(local_w, ref_gather)
    assert jnp.array_equal(local_ids, inputs)

    # Eval mode, fast path (single cast output).
    out_eval = casted_sparse_embedding_forward(
        weights, inputs, cast_to=cast_to, training=False)
    jax.block_until_ready(out_eval)
    assert out_eval.shape == (batch_size, embedding_dim) and out_eval.dtype == cast_to
    assert jnp.array_equal(out_eval, ref_out)

    # Large-table (HBM DMA-ring) path, exercised explicitly on the same data.
    out_h, local_w_h, _ = casted_sparse_embedding_forward(
        weights, inputs, cast_to=cast_to, training=True, force_hbm_path=True)
    out_eval_h = casted_sparse_embedding_forward(
        weights, inputs, cast_to=cast_to, training=False, force_hbm_path=True)
    jax.block_until_ready((out_h, local_w_h, out_eval_h))
    assert jnp.array_equal(out_h, ref_out)
    assert jnp.array_equal(local_w_h, ref_gather)
    assert jnp.array_equal(out_eval_h, ref_out)

    print("KERNEL_OK")
</pallas_src>

<mosaic_0001>
module attributes {stable_mosaic.version = 11 : i64} {
  func.func @kernel(%arg0: i32, %arg1: memref<8xi32, #tpu.memory_space<smem>>, %arg2: memref<64x128xf32, #tpu.memory_space<vmem>>, %arg3: memref<8x128xbf16, #tpu.memory_space<vmem>>, %arg4: memref<8x128xf32, #tpu.memory_space<vmem>>) attributes {dimension_semantics = [#tpu.dimension_semantics<parallel>], iteration_bounds = array<i64: 1>, scalar_prefetch = 1 : i64, scratch_operands = 0 : i64, tpu.core_type = #tpu.core_type<tc>, window_params = [{pipeline_mode = #tpu.pipeline_mode<synchronous>, transform_indices = @transform_0, window_bounds = array<i64: 64, 128>}, {transform_indices = @transform_1, window_bounds = array<i64: 8, 128>}, {transform_indices = @transform_2, window_bounds = array<i64: 8, 128>}]} {
    %c8_i32 = arith.constant 8 : i32
    %0 = arith.muli %arg0, %c8_i32 : i32
    %1 = tpu.iota {dimensions = array<i32: 0>} : vector<8x128xi32>
    %c0_i32 = arith.constant 0 : i32
    %c1_i32 = arith.constant 1 : i32
    %2 = arith.muli %c0_i32, %c1_i32 : i32
    %c0_i32_0 = arith.constant 0 : i32
    %3 = arith.addi %c0_i32_0, %2 : i32
    %c8_i32_1 = arith.constant 8 : i32
    %4 = arith.muli %3, %c8_i32_1 : i32
    %5 = tpu.assume_multiple %4, 8 : i32
    %c8_i32_2 = arith.constant 8 : i32
    %6 = arith.muli %3, %c8_i32_2 : i32
    %7 = arith.addi %0, %6 : i32
    %c0_i32_3 = arith.constant 0 : i32
    %8 = arith.addi %7, %c0_i32_3 : i32
    %9 = arith.index_cast %8 : i32 to index
    %10 = memref.load %arg1[%9] : memref<8xi32, #tpu.memory_space<smem>>
    %11 = arith.index_cast %10 : i32 to index
    %c0 = arith.constant 0 : index
    %12 = vector.load %arg2[%11, %c0] : memref<64x128xf32, #tpu.memory_space<vmem>>, vector<1x128xf32>
    %13 = vector.shape_cast %12 : vector<1x128xf32> to vector<1x128xf32>
    %14 = vector.broadcast %13 : vector<1x128xf32> to vector<8x128xf32>
    %c8_i32_4 = arith.constant 8 : i32
    %15 = arith.muli %3, %c8_i32_4 : i32
    %16 = arith.addi %0, %15 : i32
    %c1_i32_5 = arith.constant 1 : i32
    %17 = arith.addi %16, %c1_i32_5 : i32
    %18 = arith.index_cast %17 : i32 to index
    %19 = memref.load %arg1[%18] : memref<8xi32, #tpu.memory_space<smem>>
    %20 = arith.index_cast %19 : i32 to index
    %c0_6 = arith.constant 0 : index
    %21 = vector.load %arg2[%20, %c0_6] : memref<64x128xf32, #tpu.memory_space<vmem>>, vector<1x128xf32>
    %22 = vector.shape_cast %21 : vector<1x128xf32> to vector<1x128xf32>
    %23 = vector.broadcast %22 : vector<1x128xf32> to vector<8x128xf32>
    %c1_i32_7 = arith.constant 1 : i32
    %24 = vector.broadcast %c1_i32_7 : i32 to vector<8x128xi32>
    %25 = arith.cmpi eq, %1, %24 : vector<8x128xi32>
    %26 = arith.select %25, %23, %14 : vector<8x128xi1>, vector<8x128xf32>
    %c8_i32_8 = arith.constant 8 : i32
    %27 = arith.muli %3, %c8_i32_8 : i32
    %28 = arith.addi %0, %27 : i32
    %c2_i32 = arith.constant 2 : i32
    %29 = arith.addi %28, %c2_i32 : i32
    %30 = arith.index_cast %29 : i32 to index
    %31 = memref.load %arg1[%30] : memref<8xi32, #tpu.memory_space<smem>>
    %32 = arith.index_cast %31 : i32 to index
    %c0_9 = arith.constant 0 : index
    %33 = vector.load %arg2[%32, %c0_9] : memref<64x128xf32, #tpu.memory_space<vmem>>, vector<1x128xf32>
    %34 = vector.shape_cast %33 : vector<1x128xf32> to vector<1x128xf32>
    %35 = vector.broadcast %34 : vector<1x128xf32> to vector<8x128xf32>
    %c2_i32_10 = arith.constant 2 : i32
    %36 = vector.broadcast %c2_i32_10 : i32 to vector<8x128xi32>
    %37 = arith.cmpi eq, %1, %36 : vector<8x128xi32>
    %38 = arith.select %37, %35, %26 : vector<8x128xi1>, vector<8x128xf32>
    %c8_i32_11 = arith.constant 8 : i32
    %39 = arith.muli %3, %c8_i32_11 : i32
    %40 = arith.addi %0, %39 : i32
    %c3_i32 = arith.constant 3 : i32
    %41 = arith.addi %40, %c3_i32 : i32
    %42 = arith.index_cast %41 : i32 to index
    %43 = memref.load %arg1[%42] : memref<8xi32, #tpu.memory_space<smem>>
    %44 = arith.index_cast %43 : i32 to index
    %c0_12 = arith.constant 0 : index
    %45 = vector.load %arg2[%44, %c0_12] : memref<64x128xf32, #tpu.memory_space<vmem>>, vector<1x128xf32>
    %46 = vector.shape_cast %45 : vector<1x128xf32> to vector<1x128xf32>
    %47 = vector.broadcast %46 : vector<1x128xf32> to vector<8x128xf32>
    %c3_i32_13 = arith.constant 3 : i32
    %48 = vector.broadcast %c3_i32_13 : i32 to vector<8x128xi32>
    %49 = arith.cmpi eq, %1, %48 : vector<8x128xi32>
    %50 = arith.select %49, %47, %38 : vector<8x128xi1>, vector<8x128xf32>
    %c8_i32_14 = arith.constant 8 : i32
    %51 = arith.muli %3, %c8_i32_14 : i32
    %52 = arith.addi %0, %51 : i32
    %c4_i32 = arith.constant 4 : i32
    %53 = arith.addi %52, %c4_i32 : i32
    %54 = arith.index_cast %53 : i32 to index
    %55 = memref.load %arg1[%54] : memref<8xi32, #tpu.memory_space<smem>>
    %56 = arith.index_cast %55 : i32 to index
    %c0_15 = arith.constant 0 : index
    %57 = vector.load %arg2[%56, %c0_15] : memref<64x128xf32, #tpu.memory_space<vmem>>, vector<1x128xf32>
    %58 = vector.shape_cast %57 : vector<1x128xf32> to vector<1x128xf32>
    %59 = vector.broadcast %58 : vector<1x128xf32> to vector<8x128xf32>
    %c4_i32_16 = arith.constant 4 : i32
    %60 = vector.broadcast %c4_i32_16 : i32 to vector<8x128xi32>
    %61 = arith.cmpi eq, %1, %60 : vector<8x128xi32>
    %62 = arith.select %61, %59, %50 : vector<8x128xi1>, vector<8x128xf32>
    %c8_i32_17 = arith.constant 8 : i32
    %63 = arith.muli %3, %c8_i32_17 : i32
    %64 = arith.addi %0, %63 : i32
    %c5_i32 = arith.constant 5 : i32
    %65 = arith.addi %64, %c5_i32 : i32
    %66 = arith.index_cast %65 : i32 to index
    %67 = memref.load %arg1[%66] : memref<8xi32, #tpu.memory_space<smem>>
    %68 = arith.index_cast %67 : i32 to index
    %c0_18 = arith.constant 0 : index
    %69 = vector.load %arg2[%68, %c0_18] : memref<64x128xf32, #tpu.memory_space<vmem>>, vector<1x128xf32>
    %70 = vector.shape_cast %69 : vector<1x128xf32> to vector<1x128xf32>
    %71 = vector.broadcast %70 : vector<1x128xf32> to vector<8x128xf32>
    %c5_i32_19 = arith.constant 5 : i32
    %72 = vector.broadcast %c5_i32_19 : i32 to vector<8x128xi32>
    %73 = arith.cmpi eq, %1, %72 : vector<8x128xi32>
    %74 = arith.select %73, %71, %62 : vector<8x128xi1>, vector<8x128xf32>
    %c8_i32_20 = arith.constant 8 : i32
    %75 = arith.muli %3, %c8_i32_20 : i32
    %76 = arith.addi %0, %75 : i32
    %c6_i32 = arith.constant 6 : i32
    %77 = arith.addi %76, %c6_i32 : i32
    %78 = arith.index_cast %77 : i32 to index
    %79 = memref.load %arg1[%78] : memref<8xi32, #tpu.memory_space<smem>>
    %80 = arith.index_cast %79 : i32 to index
    %c0_21 = arith.constant 0 : index
    %81 = vector.load %arg2[%80, %c0_21] : memref<64x128xf32, #tpu.memory_space<vmem>>, vector<1x128xf32>
    %82 = vector.shape_cast %81 : vector<1x128xf32> to vector<1x128xf32>
    %83 = vector.broadcast %82 : vector<1x128xf32> to vector<8x128xf32>
    %c6_i32_22 = arith.constant 6 : i32
    %84 = vector.broadcast %c6_i32_22 : i32 to vector<8x128xi32>
    %85 = arith.cmpi eq, %1, %84 : vector<8x128xi32>
    %86 = arith.select %85, %83, %74 : vector<8x128xi1>, vector<8x128xf32>
    %c8_i32_23 = arith.constant 8 : i32
    %87 = arith.muli %3, %c8_i32_23 : i32
    %88 = arith.addi %0, %87 : i32
    %c7_i32 = arith.constant 7 : i32
    %89 = arith.addi %88, %c7_i32 : i32
    %90 = arith.index_cast %89 : i32 to index
    %91 = memref.load %arg1[%90] : memref<8xi32, #tpu.memory_space<smem>>
    %92 = arith.index_cast %91 : i32 to index
    %c0_24 = arith.constant 0 : index
    %93 = vector.load %arg2[%92, %c0_24] : memref<64x128xf32, #tpu.memory_space<vmem>>, vector<1x128xf32>
    %94 = vector.shape_cast %93 : vector<1x128xf32> to vector<1x128xf32>
    %95 = vector.broadcast %94 : vector<1x128xf32> to vector<8x128xf32>
    %c7_i32_25 = arith.constant 7 : i32
    %96 = vector.broadcast %c7_i32_25 : i32 to vector<8x128xi32>
    %97 = arith.cmpi eq, %1, %96 : vector<8x128xi32>
    %98 = arith.select %97, %95, %86 : vector<8x128xi1>, vector<8x128xf32>
    %99 = arith.index_cast %5 : i32 to index
    %c0_26 = arith.constant 0 : index
    %100 = vector.load %arg4[%99, %c0_26] : memref<8x128xf32, #tpu.memory_space<vmem>>, vector<8x128xf32>
    tpu.vector_store %arg4[%99, %c0_26], %98 {strides = array<i32>} : memref<8x128xf32, #tpu.memory_space<vmem>>, vector<8x128xf32>,
    %c1_i32_27 = arith.constant 1 : i32
    %c0_28 = arith.constant 0 : index
    %c0_29 = arith.constant 0 : index
    %101 = vector.load %arg4[%c0_28, %c0_29] : memref<8x128xf32, #tpu.memory_space<vmem>>, vector<8x128xf32>
    %102 = arith.truncf %101 : vector<8x128xf32> to vector<8x128xbf16>
    %c0_30 = arith.constant 0 : index
    %c0_31 = arith.constant 0 : index
    %103 = vector.load %arg3[%c0_30, %c0_31] : memref<8x128xbf16, #tpu.memory_space<vmem>>, vector<8x128xbf16>
    tpu.vector_store %arg3[%c0_30, %c0_31], %102 {strides = array<i32>} : memref<8x128xbf16, #tpu.memory_space<vmem>>, vector<8x128xbf16>,
    return
  }
  func.func @transform_0(%arg0: i32, %arg1: memref<8xi32, #tpu.memory_space<smem>>) -> (i32, i32) {
    %c0_i32 = arith.constant 0 : i32
    %c0_i32_0 = arith.constant 0 : i32
    %c0_i32_1 = arith.constant 0 : i32
    return %c0_i32, %c0_i32_0 : i32, i32
  }
  func.func @transform_1(%arg0: i32, %arg1: memref<8xi32, #tpu.memory_space<smem>>) -> (i32, i32) {
    %c0_i32 = arith.constant 0 : i32
    %c0_i32_0 = arith.constant 0 : i32
    return %arg0, %c0_i32 : i32, i32
  }
  func.func @transform_2(%arg0: i32, %arg1: memref<8xi32, #tpu.memory_space<smem>>) -> (i32, i32) {
    %c0_i32 = arith.constant 0 : i32
    %c0_i32_0 = arith.constant 0 : i32
    return %arg0, %c0_i32 : i32, i32
  }
}

</mosaic_0001>

<llo_original>
// kernel: tpu_custom_call.1
$region0: #{tpu_custom_call.1}
  #allocation0 [shape = 'u32[]', space=smem, size = 0x4, offset = 0x4, fixed_abs, tag = 'smem constant byte address 0x4 - core index']
  #allocation1 [shape = 'u32[144,128]{1,0:T(1,128)}', space=vmem, size = 0x12000, scoped, tag = 'internal scratch']
  #allocation2 [shape = 's32[1]{0}', space=sflag, size = 0x4, scoped, tag = 'scoped memory for tpu_custom_call.1']
  #allocation3 [shape = 'u8[512]{0}', space=smem, size = 0x200, scoped, tag = 'prefetched SMEM operand 0']
  %s0 = inlined_call_operand.hbm [shape: s32[8], index: 0, kind: input, shape index: {}]
  %s1 = inlined_call_operand.hbm [shape: f32[64,128], index: 1, kind: input, shape index: {}]
  %s2 = inlined_call_operand.hbm [shape: bf16[8,128], index: 2, kind: output, shape index: {0}]
  %s3 = inlined_call_operand.hbm [shape: f32[8,128], index: 3, kind: output, shape index: {1}]
  %4 = xla_tuple %s2, %s3
  %s5 = sld [smem:[#allocation0]]
  $region26: #{tpu_custom_call.1} parent=0
    _
  %s7 = ssub.s32 1, %s5
  %s8 = scalar_select 0, %s7, %s5
  %10 = dma.hbm_to_smem %s0, 16, [#allocation3], [#allocation2]
  %11 = dma.done [#allocation2], 16
  %12 = sfence
  $region1: #{tpu_custom_call.1} parent=0
    #allocation4 [shape = 'u8[32768]{0}', space=vmem, size = 0x8000, scoped, tag = 'input window, operand 1, single buffered']
    #allocation5 [shape = 's32[1]{0}', space=sflag, size = 0x4, scoped, tag = 'scoped memory for tpu_custom_call.1']
    #allocation6 [shape = 's32[1]{0}', space=sflag, size = 0x4, scoped, tag = 'scoped memory for tpu_custom_call.1']
    #allocation7 [shape = 'u8[2048]{0}', space=vmem, size = 0x800, scoped, tag = 'output window, operand 0, single buffered']
    #allocation8 [shape = 'u8[4096]{0}', space=vmem, size = 0x1000, scoped, tag = 'output window, operand 1, single buffered']
    #allocation9 [shape = 's32[1]{0}', space=sflag, size = 0x4, scoped, tag = 'scoped memory for tpu_custom_call.1']
    %13 = vsyncpa [#allocation5], 0
    %14 = vsyncpa [#allocation6], 0
    %15 = vsyncpa [#allocation9], 0
    // Predicated region
    $region2: #{tpu_custom_call.1} parent=1 // pred_check
      _
    $region3: #{tpu_custom_call.1} parent=1 // pred_check_branch
      %17 = sbr.rel (0) target = $region5
    $region4: #{tpu_custom_call.1} parent=1 // pred_region
      %s19 = ssub.s32 1024, 1024
      %20 = vsyncadd [#allocation5], %s19
      %s21 = sshll.u32 [#allocation4], 4
      %s22 = int_to_ptr.vmem [resolvable:$true] %s21
      %27 = dma.hbm_to_vmem [thread:$0]  %s1, 1024, %s22, [#allocation5], 128, 128, 8
    $region5: #{tpu_custom_call.1} parent=1 // pred_fallthru
      _
    // Predicated region
    $region6: #{tpu_custom_call.1} parent=1 // pred_check
      _
    $region7: #{tpu_custom_call.1} parent=1 // pred_check_branch
      %29 = sbr.rel (0) target = $region9
    $region8: #{tpu_custom_call.1} parent=1 // pred_region
      %30 = dma.done [#allocation5], 1024
    $region9: #{tpu_custom_call.1} parent=1 // pred_fallthru
      _
    %s31 = smul.u32 0, 8
    %v32 = vlaneseq
    %v33 = vshrl.u32 %v32, 7
    %s34 = sld [smem:[#allocation3 + %s31]]
    %s35 = scalar_lea.vmem [#allocation4], %s34
    %v36 = vld [vmem:[%s35] sm:$0x1]
    %v37 = vlaneseq
    %v38 = vshrl.u32 %v37, 7
    %v39 = vsub.s32 0, %v38
    %v40 = vrot.slane %v36, %v39
    %s41 = sadd.s32 %s31, 1
    %s42 = sld [smem:[#allocation3 + %s41]]
    %s43 = scalar_lea.vmem [#allocation4], %s42
    %v44 = vld [vmem:[%s43] sm:$0x1]
    %v45 = vlaneseq
    %v46 = vshrl.u32 %v45, 7
    %v47 = vsub.s32 0, %v46
    %v48 = vrot.slane %v44, %v47
    %vm49 = vcmp.eq.s32.totalorder %v33, 1
    %v50 = vsel %vm49, %v48, %v40
    %s51 = sadd.s32 %s31, 2
    %s52 = sld [smem:[#allocation3 + %s51]]
    %s53 = scalar_lea.vmem [#allocation4], %s52
    %v54 = vld [vmem:[%s53] sm:$0x1]
    %v55 = vlaneseq
    %v56 = vshrl.u32 %v55, 7
    %v57 = vsub.s32 0, %v56
    %v58 = vrot.slane %v54, %v57
    %vm59 = vcmp.eq.s32.totalorder %v33, 2
    %v60 = vsel %vm59, %v58, %v50
    %s61 = sadd.s32 %s31, 3
    %s62 = sld [smem:[#allocation3 + %s61]]
    %s63 = scalar_lea.vmem [#allocation4], %s62
    %v64 = vld [vmem:[%s63] sm:$0x1]
    %v65 = vlaneseq
    %v66 = vshrl.u32 %v65, 7
    %v67 = vsub.s32 0, %v66
    %v68 = vrot.slane %v64, %v67
    %vm69 = vcmp.eq.s32.totalorder %v33, 3
    %v70 = vsel %vm69, %v68, %v60
    %s71 = sadd.s32 %s31, 4
    %s72 = sld [smem:[#allocation3 + %s71]]
    %s73 = scalar_lea.vmem [#allocation4], %s72
    %v74 = vld [vmem:[%s73] sm:$0x1]
    %v75 = vlaneseq
    %v76 = vshrl.u32 %v75, 7
    %v77 = vsub.s32 0, %v76
    %v78 = vrot.slane %v74, %v77
    %vm79 = vcmp.eq.s32.totalorder %v33, 4
    %v80 = vsel %vm79, %v78, %v70
    %s81 = sadd.s32 %s31, 5
    %s82 = sld [smem:[#allocation3 + %s81]]
    %s83 = scalar_lea.vmem [#allocation4], %s82
    %v84 = vld [vmem:[%s83] sm:$0x1]
    %v85 = vlaneseq
    %v86 = vshrl.u32 %v85, 7
    %v87 = vsub.s32 0, %v86
    %v88 = vrot.slane %v84, %v87
    %vm89 = vcmp.eq.s32.totalorder %v33, 5
    %v90 = vsel %vm89, %v88, %v80
    %s91 = sadd.s32 %s31, 6
    %s92 = sld [smem:[#allocation3 + %s91]]
    %s93 = scalar_lea.vmem [#allocation4], %s92
    %v94 = vld [vmem:[%s93] sm:$0x1]
    %v95 = vlaneseq
    %v96 = vshrl.u32 %v95, 7
    %v97 = vsub.s32 0, %v96
    %v98 = vrot.slane %v94, %v97
    %vm99 = vcmp.eq.s32.totalorder %v33, 6
    %v100 = vsel %vm99, %v98, %v90
    %s101 = sadd.s32 %s31, 7
    %s102 = sld [smem:[#allocation3 + %s101]]
    %s103 = scalar_lea.vmem [#allocation4], %s102
    %v104 = vld [vmem:[%s103] sm:$0x1]
    %v105 = vlaneseq
    %v106 = vshrl.u32 %v105, 7
    %v107 = vsub.s32 0, %v106
    %v108 = vrot.slane %v104, %v107
    %vm109 = vcmp.eq.s32.totalorder %v33, 7
    %v110 = vsel %vm109, %v108, %v100
    %111 = vst [vmem:[#allocation8] sm:$0xff] %v110
    %v112 = vld [vmem:[#allocation8] sm:$0xff]
    %v113 = vpack.c.bf16 %v112, %v112
    %114 = vst [vmem:[#allocation7] sm:$0xf] %v113
    // Predicated region
    $region10: #{tpu_custom_call.1} parent=1 // pred_check
      _
    $region11: #{tpu_custom_call.1} parent=1 // pred_check_branch
      %116 = sbr.rel (0) target = $region13
    $region12: #{tpu_custom_call.1} parent=1 // pred_region
      %s118 = ssub.s32 64, 64
      %119 = vsyncadd [#allocation6], %s118
      %s121 = sshll.u32 [#allocation7], 4
      %s122 = int_to_ptr.vmem [resolvable:$true] %s121
      %124 = dma.vmem_to_hbm [thread:$0]  %s122, 64, %s2, [#allocation6]
    $region13: #{tpu_custom_call.1} parent=1 // pred_fallthru
      _
    // Predicated region
    $region14: #{tpu_custom_call.1} parent=1 // pred_check
      _
    $region15: #{tpu_custom_call.1} parent=1 // pred_check_branch
      %126 = sbr.rel (0) target = $region17
    $region16: #{tpu_custom_call.1} parent=1 // pred_region
      %s128 = ssub.s32 128, 128
      %129 = vsyncadd [#allocation9], %s128
      %s131 = sshll.u32 [#allocation8], 4
      %s132 = int_to_ptr.vmem [resolvable:$true] %s131
      %134 = dma.vmem_to_hbm [thread:$0]  %s132, 128, %s3, [#allocation9]
    $region17: #{tpu_custom_call.1} parent=1 // pred_fallthru
      _
    // Predicated region
    $region18: #{tpu_custom_call.1} parent=1 // pred_check
      _
    $region19: #{tpu_custom_call.1} parent=1 // pred_check_branch
      %136 = sbr.rel (0) target = $region21
    $region20: #{tpu_custom_call.1} parent=1 // pred_region
      %137 = dma.done [#allocation6], 64
    $region21: #{tpu_custom_call.1} parent=1 // pred_fallthru
      _
    // Predicated region
    $region22: #{tpu_custom_call.1} parent=1 // pred_check
      _
    $region23: #{tpu_custom_call.1} parent=1 // pred_check_branch
      %139 = sbr.rel (0) target = $region25
    $region24: #{tpu_custom_call.1} parent=1 // pred_region
      %140 = dma.done [#allocation9], 128
    $region25: #{tpu_custom_call.1} parent=1 // pred_fallthru
      _
    %141 = vsyncpa [#allocation5], 1
    %142 = vsyncpa [#allocation6], 1
    %143 = vsyncpa [#allocation9], 1

</llo_original>
